<compile_context>
chip_gen: v7x
topology: tpu7x:2x2x1
jax: 0.10.0
libtpu: 0.0.40
codegen_flags: <defaults>
</compile_context>

<pallas_src>
import functools

import jax
import jax.numpy as jnp
from jax import lax
from jax.experimental import pallas as pl
from jax.experimental.pallas import tpu as pltpu


# ---------------------------------------------------------------------------
# Negative-batch kernel ('head-batch' / 'tail-batch'):
#   score[b, n] = gamma - sum_d | ent[neg[b, n], d] + sign * base[b, d] |
# where base = (relation - tail) and sign = +1 for head-batch,
#       base = (head + relation)  and sign = -1 for tail-batch
# (|x| == |-x| makes both modes reduce to this form).
# ---------------------------------------------------------------------------
def _transe_neg_kernel(idx_ref, base_ref, ent_ref, out_ref, rows_ref, sem_ref,
                       *, gamma, sign, block_b, n_neg):
    """Scores one (block_b, n_neg) tile.

    idx_ref : SMEM (B, n_neg) int32   negative entity ids (scalar prefetch)
    base_ref: VMEM (block_b, D)       per-triple constant part
    ent_ref : HBM  (nentity, D)       full entity table (memory_space=pl.ANY)
    out_ref : VMEM (block_b, n_neg)   scores (N on the lane axis)
    rows_ref: VMEM (2, n_neg, D)      double-buffered gathered rows
    sem_ref : DMA semaphores (2,)
    """
    g = pl.program_id(0)
    b0 = g * block_b

    # Compute sub-chunk (rows of the gathered tile processed at once) to keep
    # vector-register pressure low; purely a static trace-time choice.
    cstep = n_neg
    for cand in (64, 32, 16, 8):
        if n_neg % cand == 0:
            cstep = cand
            break

    def issue(i, slot):
        # Start n_neg row DMAs (entity rows for tile-local batch row i) into
        # buffer `slot`.  All copies signal the same per-slot semaphore.
        def body(n, carry):
            e = idx_ref[b0 + i, n]
            pltpu.make_async_copy(
                ent_ref.at[pl.ds(e, 1), :],
                rows_ref.at[slot, pl.ds(n, 1), :],
                sem_ref.at[slot],
            ).start()
            return carry

        lax.fori_loop(0, n_neg, body, 0)

    def wait_all(slot):
        # Wait for every row copy of this slot (same-sized copies -> waiting
        # once per issued descriptor on the shared semaphore).
        def body(n, carry):
            pltpu.make_async_copy(
                ent_ref.at[pl.ds(0, 1), :],
                rows_ref.at[slot, pl.ds(n, 1), :],
                sem_ref.at[slot],
            ).wait()
            return carry

        lax.fori_loop(0, n_neg, body, 0)

    # Prime the first buffer, then double-buffer across the batch rows of the
    # tile: prefetch row i+1 while computing on row i.
    issue(0, 0)
    for i in range(block_b):                    # static loop (block_b is small)
        slot = i & 1
        if i + 1 < block_b:
            issue(i + 1, 1 - slot)
        wait_all(slot)

        base_row = base_ref[pl.ds(i, 1), :]          # (1, D)
        rows_view = rows_ref.at[slot]                # (n_neg, D) view, no load

        for j in range(0, n_neg, cstep):             # static compute sub-chunks
            blk = rows_view[pl.ds(j, cstep), :]      # (cstep, D)
            s = blk + sign * base_row                # broadcast over sublanes
            col = jnp.sum(jnp.abs(s), axis=-1, keepdims=True)   # (cstep, 1)
            # Lane-dense row store: flip the reduced column onto lanes.
            out_ref[pl.ds(i, 1), pl.ds(j, cstep)] = gamma - jnp.transpose(col)


# ---------------------------------------------------------------------------
# 'single' mode kernel (degenerate N == 1 case): plain 2-D blocks, no
# sublane-padded (1, 1, D) tiles and no per-row grid overhead.
# ---------------------------------------------------------------------------
def _transe_single_kernel(h_ref, r_ref, t_ref, o_ref, *, gamma):
    s = h_ref[...] + r_ref[...] - t_ref[...]
    o_ref[...] = gamma - jnp.sum(jnp.abs(s), axis=-1, keepdims=True)


# ---------------------------------------------------------------------------
# Jitted wrappers (whole forward under one jit per mode).
# ---------------------------------------------------------------------------
@functools.partial(jax.jit, static_argnames=("gamma",))
def transe_single(entity_embedding, relation_embedding, sample, *, gamma):
    h = entity_embedding[sample[:, 0]]      # (B, D) — tiny gathers
    r = relation_embedding[sample[:, 1]]
    t = entity_embedding[sample[:, 2]]
    b, d = h.shape
    return pl.pallas_call(
        functools.partial(_transe_single_kernel, gamma=float(gamma)),
        out_shape=jax.ShapeDtypeStruct((b, 1), jnp.float32),
        grid=(1,),
        in_specs=[pl.BlockSpec((b, d), lambda i: (0, 0))] * 3,
        out_specs=pl.BlockSpec((b, 1), lambda i: (0, 0)),
    )(h, r, t)


@functools.partial(jax.jit,
                   static_argnames=("gamma", "head_batch", "block_b"))
def transe_negative(entity_embedding, relation_embedding, pos, neg, *,
                    gamma, head_batch, block_b):
    """Fused-gather TransE scoring for 'head-batch' / 'tail-batch' modes."""
    bsz, n_neg = neg.shape
    _, d = entity_embedding.shape

    if head_batch:
        # score = h_neg + (r - t)
        base = relation_embedding[pos[:, 1]] - entity_embedding[pos[:, 2]]
        sign = 1.0
    else:
        # score = (h + r) - t_neg ;  |x| == |-x|
        base = entity_embedding[pos[:, 0]] + relation_embedding[pos[:, 1]]
        sign = -1.0

    tb = block_b if (bsz % block_b == 0) else bsz   # tile of batch rows

    kernel = functools.partial(
        _transe_neg_kernel, gamma=float(gamma), sign=sign,
        block_b=tb, n_neg=n_neg)

    grid_spec = pltpu.PrefetchScalarGridSpec(
        num_scalar_prefetch=1,                      # neg ids -> SMEM
        grid=(bsz // tb,),
        in_specs=[
            pl.BlockSpec((tb, d), lambda g, idx: (g, 0)),   # base (VMEM)
            pl.BlockSpec(memory_space=pl.ANY),              # entity table (HBM)
        ],
        out_specs=pl.BlockSpec((tb, n_neg), lambda g, idx: (g, 0)),
        scratch_shapes=[
            pltpu.VMEM((2, n_neg, d), jnp.float32),         # gathered rows x2
            pltpu.SemaphoreType.DMA((2,)),                  # one sem per slot
        ],
    )

    return pl.pallas_call(
        kernel,
        out_shape=jax.ShapeDtypeStruct((bsz, n_neg), jnp.float32),
        grid_spec=grid_spec,
        compiler_params=pltpu.CompilerParams(
            dimension_semantics=("parallel",),
        ),
    )(neg.astype(jnp.int32), base, entity_embedding)


# ---------------------------------------------------------------------------
# KGEModel (TransE only) — parameters + forward glue.
# ---------------------------------------------------------------------------
class KGEModelPallas:
    def __init__(self, model_name, nentity, nrelation, hidden_dim, gamma, key,
                 block_b=8):
        if model_name != "TransE":
            raise ValueError("model %s not supported" % model_name)
        self.model_name = model_name
        self.nentity = nentity
        self.nrelation = nrelation
        self.hidden_dim = hidden_dim
        self.epsilon = 2.0
        self.gamma = float(gamma)
        self.embedding_range = (self.gamma + self.epsilon) / hidden_dim
        self.block_b = block_b

        k_ent, k_rel = jax.random.split(key)
        self.entity_embedding = jax.random.uniform(
            k_ent, (nentity, hidden_dim), dtype=jnp.float32,
            minval=-self.embedding_range, maxval=self.embedding_range)
        self.relation_embedding = jax.random.uniform(
            k_rel, (nrelation, hidden_dim), dtype=jnp.float32,
            minval=-self.embedding_range, maxval=self.embedding_range)

    def __call__(self, sample, mode="single"):
        if mode == "single":
            return transe_single(self.entity_embedding, self.relation_embedding,
                                 sample, gamma=self.gamma)
        elif mode == "head-batch":
            tail_part, head_part = sample
            return transe_negative(
                self.entity_embedding, self.relation_embedding,
                tail_part, head_part,
                gamma=self.gamma, head_batch=True, block_b=self.block_b)
        elif mode == "tail-batch":
            head_part, tail_part = sample
            return transe_negative(
                self.entity_embedding, self.relation_embedding,
                head_part, tail_part,
                gamma=self.gamma, head_batch=False, block_b=self.block_b)
        else:
            raise ValueError("mode %s not supported" % mode)


if __name__ == "__main__":
    key = jax.random.PRNGKey(0)
    k_model, k_h, k_r, k_t, k_neg = jax.random.split(key, 5)

    # Small but TPU-friendly shapes: D and N multiples of 128, B multiple of 8.
    nentity, nrelation, hidden_dim, gamma = 512, 64, 256, 12.0
    batch, n_neg = 16, 128

    model = KGEModelPallas("TransE", nentity, nrelation, hidden_dim, gamma,
                           k_model)

    positive_sample = jnp.stack(
        [
            jax.random.randint(k_h, (batch,), 0, nentity),
            jax.random.randint(k_r, (batch,), 0, nrelation),
            jax.random.randint(k_t, (batch,), 0, nentity),
        ],
        axis=1,
    ).astype(jnp.int32)                                   # (B, 3)
    negative_sample = jax.random.randint(
        k_neg, (batch, n_neg), 0, nentity).astype(jnp.int32)   # (B, N)

    s_single = model(positive_sample, mode="single")
    s_head = model((positive_sample, negative_sample), mode="head-batch")
    s_tail = model((positive_sample, negative_sample), mode="tail-batch")
    jax.block_until_ready((s_single, s_head, s_tail))

    # Pure-JAX reference (mirrors the PyTorch module).
    ee, re_ = model.entity_embedding, model.relation_embedding
    h = ee[positive_sample[:, 0]][:, None, :]
    r = re_[positive_sample[:, 1]][:, None, :]
    t = ee[positive_sample[:, 2]][:, None, :]
    neg_e = ee[negative_sample.reshape(-1)].reshape(batch, n_neg, -1)

    ref_single = gamma - jnp.sum(jnp.abs(h + r - t), axis=2)        # (B, 1)
    ref_head = gamma - jnp.sum(jnp.abs(neg_e + (r - t)), axis=2)    # (B, N)
    ref_tail = gamma - jnp.sum(jnp.abs(h + r - neg_e), axis=2)      # (B, N)

    assert s_single.shape == (batch, 1)
    assert s_head.shape == (batch, n_neg)
    assert s_tail.shape == (batch, n_neg)
    assert jnp.allclose(s_single, ref_single, atol=1e-4)
    assert jnp.allclose(s_head, ref_head, atol=1e-4)
    assert jnp.allclose(s_tail, ref_tail, atol=1e-4)

    # TODO(synk): train_step (optimizer / backward) is a host-side training
    # loop and is intentionally not translated to Pallas.

    print("KERNEL_OK")
</pallas_src>

<mosaic_0001>
module attributes {stable_mosaic.version = 11 : i64} {
  func.func @_transe_single_kernel(%arg0: i32, %arg1: memref<16x256xf32, #tpu.memory_space<vmem>>, %arg2: memref<16x256xf32, #tpu.memory_space<vmem>>, %arg3: memref<16x256xf32, #tpu.memory_space<vmem>>, %arg4: memref<16x1xf32, #tpu.memory_space<vmem>>) attributes {dimension_semantics = [#tpu.dimension_semantics<arbitrary>], iteration_bounds = array<i64: 1>, scalar_prefetch = 0 : i64, scratch_operands = 0 : i64, tpu.core_type = #tpu.core_type<tc>, window_params = [{pipeline_mode = #tpu.pipeline_mode<synchronous>, transform_indices = @transform_0, window_bounds = array<i64: 16, 256>}, {pipeline_mode = #tpu.pipeline_mode<synchronous>, transform_indices = @transform_1, window_bounds = array<i64: 16, 256>}, {pipeline_mode = #tpu.pipeline_mode<synchronous>, transform_indices = @transform_2, window_bounds = array<i64: 16, 256>}, {pipeline_mode = #tpu.pipeline_mode<synchronous>, transform_indices = @transform_3, window_bounds = array<i64: 16, 1>}]} {
    %c0 = arith.constant 0 : index
    %c0_0 = arith.constant 0 : index
    %0 = vector.load %arg1[%c0, %c0_0] : memref<16x256xf32, #tpu.memory_space<vmem>>, vector<16x256xf32>
    %c0_1 = arith.constant 0 : index
    %c0_2 = arith.constant 0 : index
    %1 = vector.load %arg2[%c0_1, %c0_2] : memref<16x256xf32, #tpu.memory_space<vmem>>, vector<16x256xf32>
    %2 = arith.addf %0, %1 : vector<16x256xf32>
    %c0_3 = arith.constant 0 : index
    %c0_4 = arith.constant 0 : index
    %3 = vector.load %arg3[%c0_3, %c0_4] : memref<16x256xf32, #tpu.memory_space<vmem>>, vector<16x256xf32>
    %4 = arith.subf %2, %3 : vector<16x256xf32>
    %5 = math.absf %4 : vector<16x256xf32>
    %cst = arith.constant dense<0.000000e+00> : vector<16xf32>
    %6 = vector.multi_reduction <add>, %5, %cst [1] : vector<16x256xf32> to vector<16xf32>
    %7 = vector.shape_cast %6 : vector<16xf32> to vector<16x1xf32>
    %cst_5 = arith.constant 1.200000e+01 : f32
    %8 = vector.broadcast %cst_5 : f32 to vector<16x1xf32>
    %9 = arith.subf %8, %7 : vector<16x1xf32>
    %c0_6 = arith.constant 0 : index
    %c0_7 = arith.constant 0 : index
    %10 = vector.load %arg4[%c0_6, %c0_7] : memref<16x1xf32, #tpu.memory_space<vmem>>, vector<16x1xf32>
    tpu.vector_store %arg4[%c0_6, %c0_7], %9 {strides = array<i32>} : memref<16x1xf32, #tpu.memory_space<vmem>>, vector<16x1xf32>,
    return
  }
  func.func @transform_0(%arg0: i32) -> (i32, i32) {
    %c0_i32 = arith.constant 0 : i32
    %c0_i32_0 = arith.constant 0 : i32
    %c0_i32_1 = arith.constant 0 : i32
    return %c0_i32, %c0_i32_0 : i32, i32
  }
  func.func @transform_1(%arg0: i32) -> (i32, i32) {
    %c0_i32 = arith.constant 0 : i32
    %c0_i32_0 = arith.constant 0 : i32
    %c0_i32_1 = arith.constant 0 : i32
    return %c0_i32, %c0_i32_0 : i32, i32
  }
  func.func @transform_2(%arg0: i32) -> (i32, i32) {
    %c0_i32 = arith.constant 0 : i32
    %c0_i32_0 = arith.constant 0 : i32
    %c0_i32_1 = arith.constant 0 : i32
    return %c0_i32, %c0_i32_0 : i32, i32
  }
  func.func @transform_3(%arg0: i32) -> (i32, i32) {
    %c0_i32 = arith.constant 0 : i32
    %c0_i32_0 = arith.constant 0 : i32
    %c0_i32_1 = arith.constant 0 : i32
    return %c0_i32, %c0_i32_0 : i32, i32
  }
}

</mosaic_0001>

<llo_original>
// kernel: transe_single.1
$region0: #{transe_single.1}
  #allocation0 [shape = 'u32[]', space=smem, size = 0x4, offset = 0x4, fixed_abs, tag = 'smem constant byte address 0x4 - core index']
  #allocation1 [shape = 'u32[144,128]{1,0:T(1,128)}', space=vmem, size = 0x12000, scoped, tag = 'internal scratch']
  %s0 = inlined_call_operand.vmem [shape: f32[16,256], index: 0, kind: input, shape index: {}]
  %s1 = inlined_call_operand.vmem [shape: f32[16,256], index: 1, kind: input, shape index: {}]
  %s2 = inlined_call_operand.vmem [shape: f32[16,256], index: 2, kind: input, shape index: {}]
  %s3 = inlined_call_operand.vmem [shape: f32[16,1], index: 3, kind: output, shape index: {}]
  %s4 = sld [smem:[#allocation0]]
  $region22: #{transe_single.1} parent=0
    _
  %s6 = ssub.s32 1, %s4
  %s7 = scalar_select 0, %s6, %s4
  // Predicated region
  $region2: #{transe_single.1} parent=0 // pred_check
    _
  $region3: #{transe_single.1} parent=0 // pred_check_branch
    %9 = sbr.rel (0) target = $region5
  $region4: #{transe_single.1} parent=0 // pred_region
    _
  $region5: #{transe_single.1} parent=0 // pred_fallthru
    _
  // Predicated region
  $region6: #{transe_single.1} parent=0 // pred_check
    _
  $region7: #{transe_single.1} parent=0 // pred_check_branch
    %11 = sbr.rel (0) target = $region9
  $region8: #{transe_single.1} parent=0 // pred_region
    _
  $region9: #{transe_single.1} parent=0 // pred_fallthru
    _
  // Predicated region
  $region10: #{transe_single.1} parent=0 // pred_check
    _
  $region11: #{transe_single.1} parent=0 // pred_check_branch
    %13 = sbr.rel (0) target = $region13
  $region12: #{transe_single.1} parent=0 // pred_region
    _
  $region13: #{transe_single.1} parent=0 // pred_fallthru
    _
  %v14 = vld [vmem:[%s0] sm:$0xff]
  %v15 = vld [vmem:[%s0 + $0x8] sm:$0xff]
  %v16 = vld [vmem:[%s0 + $0x10] sm:$0xff]
  %v17 = vld [vmem:[%s0 + $0x18] sm:$0xff]
  %v18 = vld [vmem:[%s1] sm:$0xff]
  %v19 = vld [vmem:[%s1 + $0x8] sm:$0xff]
  %v20 = vld [vmem:[%s1 + $0x10] sm:$0xff]
  %v21 = vld [vmem:[%s1 + $0x18] sm:$0xff]
  %v22 = vadd.f32 %v14, %v18
  %v23 = vadd.f32 %v15, %v19
  %v24 = vadd.f32 %v16, %v20
  %v25 = vadd.f32 %v17, %v21
  %v26 = vld [vmem:[%s2] sm:$0xff]
  %v27 = vld [vmem:[%s2 + $0x8] sm:$0xff]
  %v28 = vld [vmem:[%s2 + $0x10] sm:$0xff]
  %v29 = vld [vmem:[%s2 + $0x18] sm:$0xff]
  %v30 = vsub.f32 %v22, %v26
  %v31 = vsub.f32 %v23, %v27
  %v32 = vsub.f32 %v24, %v28
  %v33 = vsub.f32 %v25, %v29
  %v34 = vand.u32 2147483647, %v30
  %v35 = vand.u32 2147483647, %v31
  %v36 = vand.u32 2147483647, %v32
  %v37 = vand.u32 2147483647, %v33
  %v38 = vadd.f32 %v34, %v35
  %39 = vadd.xlane.f32.xlu0 %v38
  %v40 = vpop.xlane.xlu0 %39
  %v41 = vadd.f32 %v36, %v37
  %42 = vadd.xlane.f32.xlu0 %v41
  %v43 = vpop.xlane.xlu0 %42
  %v44 = vsub.f32 12.0, %v40
  %v45 = vsub.f32 12.0, %v43
  %vm46 = vcmask 7168
  %47 = vst.msk [vmem:[%s3] sm:$0xff] %vm46, %v44
  %48 = vst.msk [vmem:[%s3 + $0x8] sm:$0xff] %vm46, %v45
  // Predicated region
  $region14: #{transe_single.1} parent=0 // pred_check
    _
  $region15: #{transe_single.1} parent=0 // pred_check_branch
    %50 = sbr.rel (0) target = $region17
  $region16: #{transe_single.1} parent=0 // pred_region
    _
  $region17: #{transe_single.1} parent=0 // pred_fallthru
    _
  // Predicated region
  $region18: #{transe_single.1} parent=0 // pred_check
    _
  $region19: #{transe_single.1} parent=0 // pred_check_branch
    %52 = sbr.rel (0) target = $region21
  $region20: #{transe_single.1} parent=0 // pred_region
    _
  $region21: #{transe_single.1} parent=0 // pred_fallthru
    _

</llo_original>
